<compile_context>
chip_gen: v7x
topology: tpu7x:2x2x1
jax: 0.10.0
libtpu: 0.0.40
codegen_flags: <defaults>
</compile_context>

<pallas_src>
import math

import jax
import jax.numpy as jnp
from jax.experimental import pallas as pl
from jax.experimental.pallas import tpu as pltpu

EPS = 1e-6          # VNLeakyReLU eps (matches module EPS)
NEG_SLOPE = 0.01    # LeakyReLU / VNLeakyReLU default negative slope


# --------------------------------------------------------------------------- small utils

def _round_up(x, m):
    return ((x + m - 1) // m) * m


def _pack_planes(v):
    """(M, F, 3) torch layout -> (M, 3F) lane-packed [x | y | z] planes."""
    return jnp.concatenate([v[..., 0], v[..., 1], v[..., 2]], axis=-1)


def _blockdiag3(w):
    """(F, H) -> (3F, 3H) block-diagonal weight: one matmul for all three planes."""
    f, h = int(w.shape[0]), int(w.shape[1])
    out = jnp.zeros((3 * f, 3 * h), jnp.float32)
    wf = w.astype(jnp.float32)
    for k in range(3):
        out = out.at[k * f:(k + 1) * f, k * h:(k + 1) * h].set(wf)
    return out


def _eye_sum3(h):
    """(3H, H): packed (M,3H) @ S -> per-channel sum over x/y/z planes."""
    return jnp.concatenate([jnp.eye(h, dtype=jnp.float32)] * 3, axis=0)


def _eye_bcast3(h):
    """(H, 3H): (M,H) @ B -> per-channel value broadcast to all three planes."""
    return jnp.concatenate([jnp.eye(h, dtype=jnp.float32)] * 3, axis=1)


def _pack_weights(entries):
    """Pack a list of (name, 2-D weight) into one (R, Cmax) f32 buffer (8-row aligned
    per entry).  Returns (packed, {name: (row_offset, rows, cols)})."""
    cmax = max(int(a.shape[1]) for _, a in entries)
    offs, chunks, off = {}, [], 0
    for name, a in entries:
        r, c = int(a.shape[0]), int(a.shape[1])
        rp = _round_up(r, 8)
        buf = jnp.zeros((rp, cmax), jnp.float32).at[:r, :c].set(a.astype(jnp.float32))
        chunks.append(buf)
        offs[name] = (off, r, c)
        off += rp
    return jnp.concatenate(chunks, axis=0), offs


def _wget(w_ref, offs, name):
    row, r, c = offs[name]
    return w_ref[row:row + r, :c]      # static slice load from the packed weight buffer


# --------------------------------------------------------------------------- kernel math helpers
# Vector features are packed planes (M, 3F) = [x | y | z].

def _gv_linear_packed(sca, vec_p, wv3, wv23, ws, wg, bg, S, B):
    """GVLinear on packed planes.
    sca (M,in_s); vec_p (M,3*in_v); wv3 (3*in_v,3*hid) block-diag;
    wv23 (3*hid,3*out_v) block-diag; ws (hid+in_s,out_s); wg (out_s,out_v); bg (1,out_v);
    S (3*hid,hid) plane-sum; B (out_v,3*out_v) plane-broadcast."""
    hid = S.shape[1]
    vi = jnp.dot(vec_p, wv3, preferred_element_type=jnp.float32)          # (M, 3*hid)
    vnorm = jnp.sqrt(jnp.dot(vi * vi, S, preferred_element_type=jnp.float32))
    out_s = (jnp.dot(vnorm, ws[:hid, :], preferred_element_type=jnp.float32)
             + jnp.dot(sca, ws[hid:, :], preferred_element_type=jnp.float32))
    gate = jax.nn.sigmoid(jnp.dot(out_s, wg, preferred_element_type=jnp.float32) + bg)
    gate3 = jnp.dot(gate, B, preferred_element_type=jnp.float32)          # (M, 3*out_v)
    out_v = gate3 * jnp.dot(vi, wv23, preferred_element_type=jnp.float32)
    return out_s, out_v


def _vn_leaky_relu_packed(v_p, wdir3, S, B, slope=NEG_SLOPE):
    """VNLeakyReLU on packed planes. v_p (M,3H); wdir3 (3H,3H) block-diag;
    S (3H,H) plane-sum; B (H,3H) plane-broadcast."""
    d = jnp.dot(v_p, wdir3, preferred_element_type=jnp.float32)           # (M, 3H)
    dot = jnp.dot(v_p * d, S, preferred_element_type=jnp.float32)         # (M, H)
    dnormsq = jnp.dot(d * d, S, preferred_element_type=jnp.float32)       # (M, H)
    keep = (dot >= 0.0).astype(jnp.float32)
    coef = (1.0 - keep) * dot * pl.reciprocal(dnormsq + EPS, approx=True)  # EUP slot
    coef3 = jnp.dot(coef, B, preferred_element_type=jnp.float32)          # (M, 3H)
    return slope * v_p + (1.0 - slope) * (v_p - coef3 * d)


def _leaky_relu(x, slope=NEG_SLOPE):
    return jnp.where(x >= 0.0, x, slope * x)


# --------------------------------------------------------------------------- kernels

def _make_node_kernel(S_o, hid_n, outv_n, offs):
    skey, bkey = f"S{hid_n}", f"B{outv_n}"

    def kernel(nsca_ref, nvec_ref, w_ref, out_ref):
        W = lambda n: _wget(w_ref, offs, n)
        o_s, o_v = _gv_linear_packed(nsca_ref[...], nvec_ref[...],
                                     W("ngl_wv3"), W("ngl_wv23"), W("ngl_ws"),
                                     W("ngl_wg"), W("ngl_bg"), W(skey), W(bkey))
        # lane-dense packed output: [sca(S_o) | vx | vy | vz] via direct slice stores
        out_ref[:, :S_o] = o_s
        out_ref[:, S_o:] = o_v

    return kernel


def _make_edge_kernel(S_o, V_o, hid_e, outv_e, hid_o, offs):
    D1 = S_o + 3 * V_o

    def kernel(esca_ref, evec_ref, nfc_ref, w_ref, out_ref):
        W = lambda n: _wget(w_ref, offs, n)

        # gathered per-edge source-node features + annealing coefficient (last lane)
        g = nfc_ref[...]                       # (TE, D1 + 1)
        node_s = g[:, :S_o]
        node_v = g[:, S_o:D1]
        c = g[:, D1:D1 + 1]

        # ---- edge GVPerceptronVN
        h_s, h_v = _gv_linear_packed(esca_ref[...], evec_ref[...],
                                     W("egl_wv3"), W("egl_wv23"), W("egl_ws"),
                                     W("egl_wg"), W("egl_bg"),
                                     W(f"S{hid_e}"), W(f"B{outv_e}"))
        h_v = _vn_leaky_relu_packed(h_v, W("egvp_dir_w3"),
                                    W(f"S{outv_e}"), W(f"B{outv_e}"))
        h_s = _leaky_relu(h_s)

        # ---- message mixing
        y_s = node_s * (jnp.dot(h_s, W("sca_w"), preferred_element_type=jnp.float32)
                        + W("sca_b"))
        e2n = jnp.dot(h_s, W("e2n_w"), preferred_element_type=jnp.float32) + W("e2n_b")
        n2e = jnp.dot(node_s, W("n2e_w"), preferred_element_type=jnp.float32) + W("n2e_b")
        bvo = W(f"B{V_o}")
        e2n3 = jnp.dot(e2n, bvo, preferred_element_type=jnp.float32)       # (TE, 3V_o)
        n2e3 = jnp.dot(n2e, bvo, preferred_element_type=jnp.float32)
        ev = jnp.dot(h_v, W("evn_w3"), preferred_element_type=jnp.float32) + W("evn_b3")
        y_v = e2n3 * node_v + n2e3 * ev

        out_s, out_v = _gv_linear_packed(y_s, y_v,
                                         W("ogl_wv3"), W("ogl_wv23"), W("ogl_ws"),
                                         W("ogl_wg"), W("ogl_bg"),
                                         W(f"S{hid_o}"), W(f"B{V_o}"))

        # ---- distance annealing + single lane-dense output (direct slice stores)
        out_ref[:, :S_o] = out_s * c
        out_ref[:, S_o:] = out_v * c

    return kernel


# --------------------------------------------------------------------------- wrapper

def message_module_forward(node_scalar, node_vector, edge_scalar, edge_vector,
                           edge_index_node, dist_ij, params, *,
                           cutoff=10.0, annealing=True, edge_tile=256, node_tile=512):
    """node_scalar (N,S_n), node_vector (N,V_n,3), edge_scalar (E,Se), edge_vector (E,Ve,3),
    edge_index_node (E,), dist_ij (E,).  Returns (out_sca (E,S_o), out_vec (E,V_o,3))."""
    f32 = jnp.float32
    N, S_n = node_scalar.shape
    V_n = node_vector.shape[1]
    E, Se = edge_scalar.shape
    Ve = edge_vector.shape[1]
    S_o = params["sca_w"].shape[1]
    V_o = params["e2n_w"].shape[1]
    hid_n = params["ngl_wv"].shape[1]
    outv_n = params["ngl_wv2"].shape[1]
    hid_e = params["egl_wv"].shape[1]
    outv_e = params["egl_wv2"].shape[1]
    hid_o = params["ogl_wv"].shape[1]
    D1 = S_o + 3 * V_o

    TN = min(node_tile, _round_up(N, 8))
    NP = _round_up(N, TN)
    TE = min(edge_tile, _round_up(E, 8))
    EP = _round_up(E, TE)

    nsca = jnp.pad(node_scalar.astype(f32), ((0, NP - N), (0, 0)))
    nvec = jnp.pad(_pack_planes(node_vector.astype(f32)), ((0, NP - N), (0, 0)))
    esca = jnp.pad(edge_scalar.astype(f32), ((0, EP - E), (0, 0)))
    evec = jnp.pad(_pack_planes(edge_vector.astype(f32)), ((0, EP - E), (0, 0)))
    col = jnp.pad(edge_index_node.astype(jnp.int32), (0, EP - E))

    dist = dist_ij.reshape(E).astype(f32)
    if annealing:
        c = 0.5 * (jnp.cos(dist * math.pi / cutoff) + 1.0)
        c = c * (dist <= cutoff).astype(f32) * (dist >= 0.0).astype(f32)
    else:
        c = jnp.ones((E,), f32)
    c = jnp.pad(c, (0, EP - E)).reshape(EP, 1)

    # ---- packed weight buffers (block-diag plane weights + plane sum/broadcast matrices)
    node_entries = [("ngl_wv3", _blockdiag3(params["ngl_wv"])),
                    ("ngl_wv23", _blockdiag3(params["ngl_wv2"])),
                    ("ngl_ws", params["ngl_ws"]),
                    ("ngl_wg", params["ngl_wg"]),
                    ("ngl_bg", params["ngl_bg"]),
                    (f"S{hid_n}", _eye_sum3(hid_n)),
                    (f"B{outv_n}", _eye_bcast3(outv_n))]
    node_wpack, node_offs = _pack_weights(node_entries)

    edge_dict = {}

    def _add(name, arr):
        if name not in edge_dict:
            edge_dict[name] = arr

    _add("egl_wv3", _blockdiag3(params["egl_wv"]))
    _add("egl_wv23", _blockdiag3(params["egl_wv2"]))
    _add("egl_ws", params["egl_ws"]); _add("egl_wg", params["egl_wg"])
    _add("egl_bg", params["egl_bg"])
    _add("egvp_dir_w3", _blockdiag3(params["egvp_dir_w"]))
    _add("sca_w", params["sca_w"]); _add("sca_b", params["sca_b"])
    _add("e2n_w", params["e2n_w"]); _add("e2n_b", params["e2n_b"])
    _add("n2e_w", params["n2e_w"]); _add("n2e_b", params["n2e_b"])
    _add("evn_w3", _blockdiag3(params["evn_w"]))
    _add("evn_b3", jnp.concatenate([params["evn_b"].astype(f32)] * 3, axis=-1))
    _add("ogl_wv3", _blockdiag3(params["ogl_wv"]))
    _add("ogl_wv23", _blockdiag3(params["ogl_wv2"]))
    _add("ogl_ws", params["ogl_ws"]); _add("ogl_wg", params["ogl_wg"])
    _add("ogl_bg", params["ogl_bg"])
    for h in sorted({hid_e, outv_e, hid_o}):
        _add(f"S{h}", _eye_sum3(h))
    for h in sorted({outv_e, V_o}):
        _add(f"B{h}", _eye_bcast3(h))
    edge_wpack, edge_offs = _pack_weights(list(edge_dict.items()))

    cparams = pltpu.CompilerParams(dimension_semantics=("parallel",),
                                   vmem_limit_bytes=32 * 1024 * 1024)

    # -------- pass 1: node_gvlinear over node tiles -> packed (NP, S_o + 3*V_o)
    node_feat = pl.pallas_call(
        _make_node_kernel(S_o, hid_n, outv_n, node_offs),
        out_shape=jax.ShapeDtypeStruct((NP, D1), f32),
        grid=(NP // TN,),
        in_specs=[pl.BlockSpec((TN, S_n), lambda i: (i, 0)),
                  pl.BlockSpec((TN, 3 * V_n), lambda i: (i, 0)),
                  pl.BlockSpec(node_wpack.shape, lambda i: (0, 0))],
        out_specs=pl.BlockSpec((TN, D1), lambda i: (i, 0)),
        compiler_params=cparams,
    )(nsca, nvec, node_wpack)

    # -------- O(E) gather in JAX glue; fold annealing coefficient c in as one extra lane.
    nfc = jnp.concatenate([node_feat[col], c], axis=-1)            # (EP, D1 + 1)

    # -------- pass 2: per-edge message, tiled over edges, single lane-dense output
    out_packed = pl.pallas_call(
        _make_edge_kernel(S_o, V_o, hid_e, outv_e, hid_o, edge_offs),
        out_shape=jax.ShapeDtypeStruct((EP, D1), f32),
        grid=(EP // TE,),
        in_specs=[pl.BlockSpec((TE, Se), lambda i: (i, 0)),
                  pl.BlockSpec((TE, 3 * Ve), lambda i: (i, 0)),
                  pl.BlockSpec((TE, D1 + 1), lambda i: (i, 0)),
                  pl.BlockSpec(edge_wpack.shape, lambda i: (0, 0))],
        out_specs=pl.BlockSpec((TE, D1), lambda i: (i, 0)),
        compiler_params=cparams,
    )(esca, evec, nfc, edge_wpack)

    out_sca = out_packed[:E, :S_o]
    ov = out_packed[:E, S_o:]
    out_vec = jnp.stack([ov[:, :V_o], ov[:, V_o:2 * V_o], ov[:, 2 * V_o:]], axis=-1)
    return out_sca, out_vec


# --------------------------------------------------------------------------- deterministic params

def init_params(key, *, node_sca=32, node_vec=16, edge_sca=32, edge_vec=16,
                out_sca=32, out_vec=16):
    keys = iter(jax.random.split(key, 40))

    def w(shape, scale=0.25):
        return (scale * jax.random.normal(next(keys), shape)).astype(jnp.float32)

    def gvl(prefix, in_s, in_v, o_s, o_v):
        hid = max(in_v, o_v)
        return {f"{prefix}_wv": w((in_v, hid)), f"{prefix}_wv2": w((hid, o_v)),
                f"{prefix}_ws": w((hid + in_s, o_s)), f"{prefix}_wg": w((o_s, o_v)),
                f"{prefix}_bg": w((1, o_v))}

    p = {}
    p.update(gvl("ngl", node_sca, node_vec, out_sca, out_vec))    # node_gvlinear
    p.update(gvl("egl", edge_sca, edge_vec, edge_sca, edge_vec))  # edge_gvp.gv_linear
    p["egvp_dir_w"] = w((edge_vec, edge_vec))                     # edge_gvp.act_vec
    p["sca_w"] = w((edge_sca, out_sca)); p["sca_b"] = w((1, out_sca))
    p["e2n_w"] = w((edge_sca, out_vec)); p["e2n_b"] = w((1, out_vec))
    p["n2e_w"] = w((out_sca, out_vec)); p["n2e_b"] = w((1, out_vec))
    p["evn_w"] = w((edge_vec, out_vec)); p["evn_b"] = w((1, out_vec))  # edge_vnlinear (bias=True)
    p.update(gvl("ogl", out_sca, out_vec, out_sca, out_vec))      # out_gvlienar
    return p


# --------------------------------------------------------------------------- pure-JAX reference

_HI = jax.lax.Precision.HIGHEST


def _mm(a, b):
    return jnp.dot(a, b, precision=_HI)


def _gvlinear_ref(s, v, wv, wv2, ws, wg, bg):
    vi = jnp.einsum("nic,ih->nhc", v, wv, precision=_HI)
    vnorm = jnp.sqrt(jnp.sum(vi * vi, axis=-1))
    out_s = _mm(jnp.concatenate([vnorm, s], axis=-1), ws)
    out_v = jnp.einsum("nhc,ho->noc", vi, wv2, precision=_HI)
    gate = jax.nn.sigmoid(_mm(out_s, wg) + bg)
    return out_s, gate[..., None] * out_v


def _vnleaky_ref(v, wdir, slope=NEG_SLOPE):
    d = jnp.einsum("nic,io->noc", v, wdir, precision=_HI)
    dot = jnp.sum(v * d, axis=-1, keepdims=True)
    mask = (dot >= 0).astype(v.dtype)
    dnq = jnp.sum(d * d, axis=-1, keepdims=True)
    return slope * v + (1 - slope) * (mask * v + (1 - mask) * (v - dot / (dnq + EPS) * d))


def reference_forward(node_scalar, node_vector, edge_scalar, edge_vector, col, dist, p,
                      cutoff=10.0, annealing=True):
    ns, nv = _gvlinear_ref(node_scalar, node_vector,
                           p["ngl_wv"], p["ngl_wv2"], p["ngl_ws"], p["ngl_wg"], p["ngl_bg"])
    ns, nv = ns[col], nv[col]
    hs, hv = _gvlinear_ref(edge_scalar, edge_vector,
                           p["egl_wv"], p["egl_wv2"], p["egl_ws"], p["egl_wg"], p["egl_bg"])
    hv = _vnleaky_ref(hv, p["egvp_dir_w"])
    hs = jnp.where(hs >= 0, hs, NEG_SLOPE * hs)
    y_s = ns * (_mm(hs, p["sca_w"]) + p["sca_b"])
    y_nv = (_mm(hs, p["e2n_w"]) + p["e2n_b"])[..., None] * nv
    ev_o = jnp.einsum("nic,io->noc", hv, p["evn_w"], precision=_HI) + p["evn_b"][..., None]
    y_ev = (_mm(ns, p["n2e_w"]) + p["n2e_b"])[..., None] * ev_o
    y_v = y_nv + y_ev
    os_, ov = _gvlinear_ref(y_s, y_v,
                            p["ogl_wv"], p["ogl_wv2"], p["ogl_ws"], p["ogl_wg"], p["ogl_bg"])
    if annealing:
        c = 0.5 * (jnp.cos(dist * math.pi / cutoff) + 1.0)
        c = c * (dist <= cutoff).astype(os_.dtype) * (dist >= 0.0).astype(os_.dtype)
        os_ = os_ * c[:, None]
        ov = ov * c[:, None, None]
    return os_, ov


# --------------------------------------------------------------------------- main

if __name__ == "__main__":
    key = jax.random.PRNGKey(0)
    N, E = 10, 24
    S_n, V_n = 32, 16        # node scalar / vector channels
    Se, Ve = 32, 16          # edge scalar / vector channels
    S_o, V_o = 32, 16        # output scalar / vector channels
    cutoff = 10.0

    k1, k2, k3, k4, k5, k6, kp = jax.random.split(key, 7)
    node_scalar = jax.random.normal(k1, (N, S_n), dtype=jnp.float32)
    node_vector = jax.random.normal(k2, (N, V_n, 3), dtype=jnp.float32)
    edge_scalar = jax.random.normal(k3, (E, Se), dtype=jnp.float32)
    edge_vector = jax.random.normal(k4, (E, Ve, 3), dtype=jnp.float32)
    edge_index_node = jax.random.randint(k5, (E,), 0, N, dtype=jnp.int32)
    dist_ij = jax.random.uniform(k6, (E,), jnp.float32, 0.5, 12.0)   # some edges beyond cutoff

    params = init_params(kp, node_sca=S_n, node_vec=V_n, edge_sca=Se, edge_vec=Ve,
                         out_sca=S_o, out_vec=V_o)

    out_sca, out_vec = message_module_forward(
        node_scalar, node_vector, edge_scalar, edge_vector, edge_index_node, dist_ij,
        params, cutoff=cutoff, annealing=True)
    jax.block_until_ready((out_sca, out_vec))

    assert out_sca.shape == (E, S_o) and out_vec.shape == (E, V_o, 3)
    assert bool(jnp.all(jnp.isfinite(out_sca))) and bool(jnp.all(jnp.isfinite(out_vec)))

    ref_sca, ref_vec = reference_forward(node_scalar, node_vector, edge_scalar, edge_vector,
                                         edge_index_node, dist_ij, params,
                                         cutoff=cutoff, annealing=True)

    def _relerr(a, b):
        return float(jnp.max(jnp.abs(a - b)) / (jnp.max(jnp.abs(b)) + 1e-6))

    err_s, err_v = _relerr(out_sca, ref_sca), _relerr(out_vec, ref_vec)
    assert err_s < 5e-2, f"scalar mismatch vs reference: {err_s}"
    assert err_v < 5e-2, f"vector mismatch vs reference: {err_v}"
    print("KERNEL_OK")
</pallas_src>

<mosaic_0001>
module attributes {stable_mosaic.version = 11 : i64} {
  func.func @kernel(%arg0: i32, %arg1: memref<16x32xf32, #tpu.memory_space<vmem>>, %arg2: memref<16x48xf32, #tpu.memory_space<vmem>>, %arg3: memref<248x48xf32, #tpu.memory_space<vmem>>, %arg4: memref<16x80xf32, #tpu.memory_space<vmem>>) attributes {dimension_semantics = [#tpu.dimension_semantics<parallel>], iteration_bounds = array<i64: 1>, scalar_prefetch = 0 : i64, scratch_operands = 0 : i64, tpu.core_type = #tpu.core_type<tc>, window_params = [{transform_indices = @transform_0, window_bounds = array<i64: 16, 32>}, {transform_indices = @transform_1, window_bounds = array<i64: 16, 48>}, {pipeline_mode = #tpu.pipeline_mode<synchronous>, transform_indices = @transform_2, window_bounds = array<i64: 248, 48>}, {transform_indices = @transform_3, window_bounds = array<i64: 16, 80>}]} {
    %c0 = arith.constant 0 : index
    %c0_0 = arith.constant 0 : index
    %0 = vector.load %arg1[%c0, %c0_0] : memref<16x32xf32, #tpu.memory_space<vmem>>, vector<16x32xf32>
    %c0_1 = arith.constant 0 : index
    %c0_2 = arith.constant 0 : index
    %1 = vector.load %arg2[%c0_1, %c0_2] : memref<16x48xf32, #tpu.memory_space<vmem>>, vector<16x48xf32>
    %c0_3 = arith.constant 0 : index
    %c0_4 = arith.constant 0 : index
    %2 = vector.load %arg3[%c0_3, %c0_4] : memref<248x48xf32, #tpu.memory_space<vmem>>, vector<48x48xf32>
    %c48 = arith.constant 48 : index
    %c0_5 = arith.constant 0 : index
    %3 = vector.load %arg3[%c48, %c0_5] : memref<248x48xf32, #tpu.memory_space<vmem>>, vector<48x48xf32>
    %c96 = arith.constant 96 : index
    %c0_6 = arith.constant 0 : index
    %4 = vector.load %arg3[%c96, %c0_6] : memref<248x48xf32, #tpu.memory_space<vmem>>, vector<48x32xf32>
    %c144 = arith.constant 144 : index
    %c0_7 = arith.constant 0 : index
    %5 = vector.load %arg3[%c144, %c0_7] : memref<248x48xf32, #tpu.memory_space<vmem>>, vector<32x16xf32>
    %c176 = arith.constant 176 : index
    %c0_8 = arith.constant 0 : index
    %6 = vector.load %arg3[%c176, %c0_8] : memref<248x48xf32, #tpu.memory_space<vmem>>, vector<1x16xf32>
    %c184 = arith.constant 184 : index
    %c0_9 = arith.constant 0 : index
    %7 = vector.load %arg3[%c184, %c0_9] : memref<248x48xf32, #tpu.memory_space<vmem>>, vector<48x16xf32>
    %c232 = arith.constant 232 : index
    %c0_10 = arith.constant 0 : index
    %8 = vector.load %arg3[%c232, %c0_10] : memref<248x48xf32, #tpu.memory_space<vmem>>, vector<16x48xf32>
    %cst = arith.constant dense<0.000000e+00> : vector<16x48xf32>
    %9 = tpu.matmul %1, %2, %cst {dimension_numbers = #tpu.dot_dimension_numbers<[1], [0], [0], [1], [0, 0, 1, 1], [], []>} : vector<16x48xf32>, vector<48x48xf32>, vector<16x48xf32> -> vector<16x48xf32>
    %10 = arith.mulf %9, %9 : vector<16x48xf32>
    %cst_11 = arith.constant dense<0.000000e+00> : vector<16x16xf32>
    %11 = tpu.matmul %10, %7, %cst_11 {dimension_numbers = #tpu.dot_dimension_numbers<[1], [0], [0], [1], [0, 0, 1, 1], [], []>} : vector<16x48xf32>, vector<48x16xf32>, vector<16x16xf32> -> vector<16x16xf32>
    %12 = math.sqrt %11 : vector<16x16xf32>
    %13 = vector.extract_strided_slice %4 {offsets = [0, 0], sizes = [16, 32], strides = [1, 1]} : vector<48x32xf32> to vector<16x32xf32>
    %cst_12 = arith.constant dense<0.000000e+00> : vector<16x32xf32>
    %14 = tpu.matmul %12, %13, %cst_12 {dimension_numbers = #tpu.dot_dimension_numbers<[1], [0], [0], [1], [0, 0, 1, 1], [], []>} : vector<16x16xf32>, vector<16x32xf32>, vector<16x32xf32> -> vector<16x32xf32>
    %15 = vector.extract_strided_slice %4 {offsets = [16, 0], sizes = [32, 32], strides = [1, 1]} : vector<48x32xf32> to vector<32x32xf32>
    %cst_13 = arith.constant dense<0.000000e+00> : vector<16x32xf32>
    %16 = tpu.matmul %0, %15, %cst_13 {dimension_numbers = #tpu.dot_dimension_numbers<[1], [0], [0], [1], [0, 0, 1, 1], [], []>} : vector<16x32xf32>, vector<32x32xf32>, vector<16x32xf32> -> vector<16x32xf32>
    %17 = arith.addf %14, %16 : vector<16x32xf32>
    %cst_14 = arith.constant dense<0.000000e+00> : vector<16x16xf32>
    %18 = tpu.matmul %17, %5, %cst_14 {dimension_numbers = #tpu.dot_dimension_numbers<[1], [0], [0], [1], [0, 0, 1, 1], [], []>} : vector<16x32xf32>, vector<32x16xf32>, vector<16x16xf32> -> vector<16x16xf32>
    %19 = vector.broadcast %6 : vector<1x16xf32> to vector<16x16xf32>
    %20 = arith.addf %18, %19 : vector<16x16xf32>
    %21 = arith.negf %20 : vector<16x16xf32>
    %22 = math.exp %21 : vector<16x16xf32>
    %cst_15 = arith.constant 1.000000e+00 : f32
    %23 = vector.broadcast %cst_15 : f32 to vector<16x16xf32>
    %24 = arith.addf %23, %22 : vector<16x16xf32>
    %25 = arith.divf %23, %24 : vector<16x16xf32>
    %cst_16 = arith.constant dense<0.000000e+00> : vector<16x48xf32>
    %26 = tpu.matmul %25, %8, %cst_16 {dimension_numbers = #tpu.dot_dimension_numbers<[1], [0], [0], [1], [0, 0, 1, 1], [], []>} : vector<16x16xf32>, vector<16x48xf32>, vector<16x48xf32> -> vector<16x48xf32>
    %cst_17 = arith.constant dense<0.000000e+00> : vector<16x48xf32>
    %27 = tpu.matmul %9, %3, %cst_17 {dimension_numbers = #tpu.dot_dimension_numbers<[1], [0], [0], [1], [0, 0, 1, 1], [], []>} : vector<16x48xf32>, vector<48x48xf32>, vector<16x48xf32> -> vector<16x48xf32>
    %28 = arith.mulf %26, %27 : vector<16x48xf32>
    %c0_18 = arith.constant 0 : index
    %c0_19 = arith.constant 0 : index
    %29 = vector.load %arg4[%c0_18, %c0_19] : memref<16x80xf32, #tpu.memory_space<vmem>>, vector<16x32xf32>
    tpu.vector_store %arg4[%c0_18, %c0_19], %17 {strides = array<i32>} : memref<16x80xf32, #tpu.memory_space<vmem>>, vector<16x32xf32>,
    %c0_20 = arith.constant 0 : index
    %c32 = arith.constant 32 : index
    %30 = vector.load %arg4[%c0_20, %c32] : memref<16x80xf32, #tpu.memory_space<vmem>>, vector<16x48xf32>
    tpu.vector_store %arg4[%c0_20, %c32], %28 {strides = array<i32>} : memref<16x80xf32, #tpu.memory_space<vmem>>, vector<16x48xf32>,
    return
  }
  func.func @transform_0(%arg0: i32) -> (i32, i32) {
    %c0_i32 = arith.constant 0 : i32
    %c0_i32_0 = arith.constant 0 : i32
    return %arg0, %c0_i32 : i32, i32
  }
  func.func @transform_1(%arg0: i32) -> (i32, i32) {
    %c0_i32 = arith.constant 0 : i32
    %c0_i32_0 = arith.constant 0 : i32
    return %arg0, %c0_i32 : i32, i32
  }
  func.func @transform_2(%arg0: i32) -> (i32, i32) {
    %c0_i32 = arith.constant 0 : i32
    %c0_i32_0 = arith.constant 0 : i32
    %c0_i32_1 = arith.constant 0 : i32
    return %c0_i32, %c0_i32_0 : i32, i32
  }
  func.func @transform_3(%arg0: i32) -> (i32, i32) {
    %c0_i32 = arith.constant 0 : i32
    %c0_i32_0 = arith.constant 0 : i32
    return %arg0, %c0_i32 : i32, i32
  }
}

</mosaic_0001>

<llo_original>
// kernel: tpu_custom_call.1
$region0: #{tpu_custom_call.1}
  #allocation0 [shape = 'u32[]', space=smem, size = 0x4, offset = 0x4, fixed_abs, tag = 'smem constant byte address 0x4 - core index']
  #allocation1 [shape = 'u32[144,128]{1,0:T(1,128)}', space=vmem, size = 0x12000, scoped, tag = 'internal scratch']
  %s0 = inlined_call_operand.vmem [shape: f32[16,32], index: 0, kind: input, shape index: {}]
  %s1 = inlined_call_operand.vmem [shape: f32[16,48], index: 1, kind: input, shape index: {}]
  %s2 = inlined_call_operand.vmem [shape: f32[248,48], index: 2, kind: input, shape index: {}]
  %s3 = inlined_call_operand.hbm [shape: f32[16,80], index: 3, kind: output, shape index: {}]
  %s4 = sld [smem:[#allocation0]]
  $region22: #{tpu_custom_call.1} parent=0
    _
  %s6 = ssub.s32 1, %s4
  %s7 = scalar_select 0, %s6, %s4
  $region1: #{tpu_custom_call.1} parent=0
    #allocation2 [shape = 'u8[8192]{0}', space=vmem, size = 0x2000, scoped, tag = 'output window, operand 0, single buffered']
    #allocation3 [shape = 's32[1]{0}', space=sflag, size = 0x4, scoped, tag = 'scoped memory for tpu_custom_call.1']
    %8 = vsyncpa [#allocation3], 0
    // Predicated region
    $region2: #{tpu_custom_call.1} parent=1 // pred_check
      _
    $region3: #{tpu_custom_call.1} parent=1 // pred_check_branch
      %10 = sbr.rel (0) target = $region5
    $region4: #{tpu_custom_call.1} parent=1 // pred_region
      _
    $region5: #{tpu_custom_call.1} parent=1 // pred_fallthru
      _
    // Predicated region
    $region6: #{tpu_custom_call.1} parent=1 // pred_check
      _
    $region7: #{tpu_custom_call.1} parent=1 // pred_check_branch
      %12 = sbr.rel (0) target = $region9
    $region8: #{tpu_custom_call.1} parent=1 // pred_region
      _
    $region9: #{tpu_custom_call.1} parent=1 // pred_fallthru
      _
    // Predicated region
    $region10: #{tpu_custom_call.1} parent=1 // pred_check
      _
    $region11: #{tpu_custom_call.1} parent=1 // pred_check_branch
      %14 = sbr.rel (0) target = $region13
    $region12: #{tpu_custom_call.1} parent=1 // pred_region
      _
    $region13: #{tpu_custom_call.1} parent=1 // pred_fallthru
      _
    %v15 = vld [vmem:[%s0] sm:$0xff]
    %v16 = vld [vmem:[%s0 + $0x8] sm:$0xff]
    %v17 = vld [vmem:[%s1] sm:$0xff]
    %v18 = vld [vmem:[%s1 + $0x8] sm:$0xff]
    %v19 = vld [vmem:[%s2] sm:$0xff]
    %v20 = vld [vmem:[%s2 + $0x8] sm:$0xff]
    %v21 = vld [vmem:[%s2 + $0x10] sm:$0xff]
    %v22 = vld [vmem:[%s2 + $0x18] sm:$0xff]
    %v23 = vld [vmem:[%s2 + $0x20] sm:$0xff]
    %v24 = vld [vmem:[%s2 + $0x28] sm:$0xff]
    %v25 = vld [vmem:[%s2 + $0x30] sm:$0xff]
    %v26 = vld [vmem:[%s2 + $0x38] sm:$0xff]
    %v27 = vld [vmem:[%s2 + $0x40] sm:$0xff]
    %v28 = vld [vmem:[%s2 + $0x48] sm:$0xff]
    %v29 = vld [vmem:[%s2 + $0x50] sm:$0xff]
    %v30 = vld [vmem:[%s2 + $0x58] sm:$0xff]
    %v31 = vld [vmem:[%s2 + $0x60] sm:$0xff]
    %v32 = vld [vmem:[%s2 + $0x68] sm:$0xff]
    %v33 = vld [vmem:[%s2 + $0x70] sm:$0xff]
    %v34 = vld [vmem:[%s2 + $0x78] sm:$0xff]
    %v35 = vld [vmem:[%s2 + $0x80] sm:$0xff]
    %v36 = vld [vmem:[%s2 + $0x88] sm:$0xff]
    %v37 = vld [vmem:[%s2 + $0x90] sm:$0xff]
    %v38 = vld [vmem:[%s2 + $0x98] sm:$0xff]
    %v39 = vld [vmem:[%s2 + $0xa0] sm:$0xff]
    %v40 = vld [vmem:[%s2 + $0xa8] sm:$0xff]
    %v41 = vld [vmem:[%s2 + $0xb0] sm:$0x1]
    %v42 = vld [vmem:[%s2 + $0xb8] sm:$0xff]
    %v43 = vld [vmem:[%s2 + $0xc0] sm:$0xff]
    %v44 = vld [vmem:[%s2 + $0xc8] sm:$0xff]
    %v45 = vld [vmem:[%s2 + $0xd0] sm:$0xff]
    %v46 = vld [vmem:[%s2 + $0xd8] sm:$0xff]
    %v47 = vld [vmem:[%s2 + $0xe0] sm:$0xff]
    %v48 = vld [vmem:[%s2 + $0xe8] sm:$0xff]
    %v49 = vld [vmem:[%s2 + $0xf0] sm:$0xff]
    %vm50 = vcmask 392192
    %v52 = vsel %vm50, %v17, 0
    %v55 = vsel %vm50, %v18, 0
    %57 = vmatprep.subr.mxu0 0.0
    %58 = vmatpush1.msra.mxu0 %v19
    %59 = vmatprep.subr.mxu0 0.0
    %60 = vmatpush1.msra.mxu0 %v20
    %61 = vmatprep.subr.mxu0 0.0
    %62 = vmatpush1.msra.mxu0 %v21
    %63 = vmatprep.subr.mxu0 0.0
    %64 = vmatpush1.msra.mxu0 %v22
    %65 = vmatprep.subr.mxu0 0.0
    %66 = vmatpush1.msra.mxu0 %v23
    %67 = vmatprep.subr.mxu0 0.0
    %68 = vmatpush1.msra.mxu0 %v24
    %69 = vmatprep.subr.mxu0 0.0
    %70 = vmatpush1.msra.mxu0 0.0
    %71 = vmatprep.subr.mxu0 0.0
    %72 = vmatpush1.msra.mxu0 0.0
    %73 = vmatprep.subr.mxu0 0.0
    %74 = vmatpush1.msra.mxu0 0.0
    %75 = vmatprep.subr.mxu0 0.0
    %76 = vmatpush1.msra.mxu0 0.0
    %77 = vmatprep.subr.mxu0 0.0
    %78 = vmatpush1.msra.mxu0 0.0
    %79 = vmatprep.subr.mxu0 0.0
    %80 = vmatpush1.msra.mxu0 0.0
    %81 = vmatprep.subr.mxu0 0.0
    %82 = vmatpush1.msra.mxu0 0.0
    %83 = vmatprep.subr.mxu0 0.0
    %84 = vmatpush1.msra.mxu0 0.0
    %85 = vmatprep.subr.mxu0 0.0
    %86 = vmatpush1.msra.mxu0 0.0
    %87 = vmatprep.subr.mxu0 0.0
    %88 = vmatpush1.msra.mxu0 0.0
    %89 = vmatprep.subr.mxu0 0.0
    %90 = vmatpush1.msra.mxu0 0.0
    %91 = vmatprep.subr.mxu0 0.0
    %92 = vmatpush1.msra.mxu0 0.0
    %93 = vmatprep.subr.mxu0 0.0
    %94 = vmatpush1.msra.mxu0 0.0
    %95 = vmatprep.subr.mxu0 0.0
    %96 = vmatpush1.msra.mxu0 0.0
    %97 = vmatprep.subr.mxu0 0.0
    %98 = vmatpush1.msra.mxu0 0.0
    %99 = vmatprep.subr.mxu0 0.0
    %100 = vmatpush1.msra.mxu0 0.0
    %101 = vmatprep.subr.mxu0 0.0
    %102 = vmatpush1.msra.mxu0 0.0
    %103 = vmatprep.subr.mxu0 0.0
    %104 = vmatpush1.msra.mxu0 0.0
    %105 = vmatprep.subr.mxu0 0.0
    %106 = vmatpush1.msra.mxu0 0.0
    %107 = vmatprep.subr.mxu0 0.0
    %108 = vmatpush1.msra.mxu0 0.0
    %109 = vmatprep.subr.mxu0 0.0
    %110 = vmatpush1.msra.mxu0 0.0
    %111 = vmatprep.subr.mxu0 0.0
    %112 = vmatpush1.msra.mxu0 0.0
    %113 = vmatprep.subr.mxu0 0.0
    %114 = vmatpush1.msra.mxu0 0.0
    %115 = vmatprep.subr.mxu0 0.0
    %116 = vmatpush1.msra.mxu0 0.0
    %117 = vmatprep.subr.mxu0 0.0
    %118 = vmatpush1.msra.mxu0 0.0
    %119 = vmatprep.subr.mxu0 0.0
    %120 = vmatpush1.msra.mxu0 0.0
    %121 = vmatprep.mubr.f32.mxu0 0.0
    %122 = vmatmul.mubr.f32.gmra.mrb[0].mxu0 %v52
    %v123 = vpop.f32.mrb[0].mxu0
    %v124 = vadd.f32 0.0, %v123
    %v125 = vpop.f32.mrb[0].mxu0
    %126 = vmatprep.mubr.f32.mxu0 0.0
    %127 = vmatmul.mubr.f32.gmra.mrb[0].mxu0 %v55
    %v128 = vpop.f32.mrb[0].mxu0
    %v129 = vadd.f32 0.0, %v128
    %v130 = vpop.f32.mrb[0].mxu0
    %131 = vdwg.mxu0
    %v132 = vmul.f32 %v124, %v124
    %v133 = vmul.f32 %v129, %v129
    %v135 = vsel %vm50, %v132, 0
    %v138 = vsel %vm50, %v133, 0
    %140 = vmatprep.subr.mxu0 0.0
    %141 = vmatpush1.msra.mxu0 %v42
    %142 = vmatprep.subr.mxu0 0.0
    %143 = vmatpush1.msra.mxu0 %v43
    %144 = vmatprep.subr.mxu0 0.0
    %145 = vmatpush1.msra.mxu0 %v44
    %146 = vmatprep.subr.mxu0 0.0
    %147 = vmatpush1.msra.mxu0 %v45
    %148 = vmatprep.subr.mxu0 0.0
    %149 = vmatpush1.msra.mxu0 %v46
    %150 = vmatprep.subr.mxu0 0.0
    %151 = vmatpush1.msra.mxu0 %v47
    %152 = vmatprep.subr.mxu0 0.0
    %153 = vmatpush1.msra.mxu0 0.0
    %154 = vmatprep.subr.mxu0 0.0
    %155 = vmatpush1.msra.mxu0 0.0
    %156 = vmatprep.subr.mxu0 0.0
    %157 = vmatpush1.msra.mxu0 0.0
    %158 = vmatprep.subr.mxu0 0.0
    %159 = vmatpush1.msra.mxu0 0.0
    %160 = vmatprep.subr.mxu0 0.0
    %161 = vmatpush1.msra.mxu0 0.0
    %162 = vmatprep.subr.mxu0 0.0
    %163 = vmatpush1.msra.mxu0 0.0
    %164 = vmatprep.subr.mxu0 0.0
    %165 = vmatpush1.msra.mxu0 0.0
    %166 = vmatprep.subr.mxu0 0.0
    %167 = vmatpush1.msra.mxu0 0.0
    %168 = vmatprep.subr.mxu0 0.0
    %169 = vmatpush1.msra.mxu0 0.0
    %170 = vmatprep.subr.mxu0 0.0
    %171 = vmatpush1.msra.mxu0 0.0
    %172 = vmatprep.subr.mxu0 0.0
    %173 = vmatpush1.msra.mxu0 0.0
    %174 = vmatprep.subr.mxu0 0.0
    %175 = vmatpush1.msra.mxu0 0.0
    %176 = vmatprep.subr.mxu0 0.0
    %177 = vmatpush1.msra.mxu0 0.0
    %178 = vmatprep.subr.mxu0 0.0
    %179 = vmatpush1.msra.mxu0 0.0
    %180 = vmatprep.subr.mxu0 0.0
    %181 = vmatpush1.msra.mxu0 0.0
    %182 = vmatprep.subr.mxu0 0.0
    %183 = vmatpush1.msra.mxu0 0.0
    %184 = vmatprep.subr.mxu0 0.0
    %185 = vmatpush1.msra.mxu0 0.0
    %186 = vmatprep.subr.mxu0 0.0
    %187 = vmatpush1.msra.mxu0 0.0
    %188 = vmatprep.subr.mxu0 0.0
    %189 = vmatpush1.msra.mxu0 0.0
    %190 = vmatprep.subr.mxu0 0.0
    %191 = vmatpush1.msra.mxu0 0.0
    %192 = vmatprep.subr.mxu0 0.0
    %193 = vmatpush1.msra.mxu0 0.0
    %194 = vmatprep.subr.mxu0 0.0
    %195 = vmatpush1.msra.mxu0 0.0
    %196 = vmatprep.subr.mxu0 0.0
    %197 = vmatpush1.msra.mxu0 0.0
    %198 = vmatprep.subr.mxu0 0.0
    %199 = vmatpush1.msra.mxu0 0.0
    %200 = vmatprep.subr.mxu0 0.0
    %201 = vmatpush1.msra.mxu0 0.0
    %202 = vmatprep.subr.mxu0 0.0
    %203 = vmatpush1.msra.mxu0 0.0
    %204 = vmatprep.mubr.f32.mxu0 0.0
    %205 = vmatmul.mubr.f32.gmra.mrb[0].mxu0 %v135
    %v206 = vpop.f32.mrb[0].mxu0
    %v207 = vadd.f32 0.0, %v206
    %v208 = vpop.f32.mrb[0].mxu0
    %209 = vmatprep.mubr.f32.mxu0 0.0
    %210 = vmatmul.mubr.f32.gmra.mrb[0].mxu0 %v138
    %v211 = vpop.f32.mrb[0].mxu0
    %v212 = vadd.f32 0.0, %v211
    %v213 = vpop.f32.mrb[0].mxu0
    %214 = vdwg.mxu0
    %v215 = vrsqrt.pop %v207
    %v216 = vmul.f32 %v207, %v215
    %vm217 = vcmp.eq.f32.partialorder %v207, inf
    %v218 = vsel %vm217, %v207, %v216
    %vm219 = vcmp.eq.f32.partialorder %v207, 0.0
    %v220 = vand.u32 %v207, 2147483648
    %v221 = vsel %vm219, %v220, %v218
    %v222 = vrsqrt.pop %v212
    %v223 = vmul.f32 %v212, %v222
    %vm224 = vcmp.eq.f32.partialorder %v212, inf
    %v225 = vsel %vm224, %v212, %v223
    %vm226 = vcmp.eq.f32.partialorder %v212, 0.0
    %v227 = vand.u32 %v212, 2147483648
    %v228 = vsel %vm226, %v227, %v225
    %vm229 = vcmask 261120
    %v231 = vsel %vm229, %v15, 0
    %v234 = vsel %vm229, %v16, 0
    %236 = vmatprep.subr.mxu0 0.0
    %237 = vmatpush1.msra.mxu0 %v33
    %238 = vmatprep.subr.mxu0 0.0
    %239 = vmatpush1.msra.mxu0 %v34
    %240 = vmatprep.subr.mxu0 0.0
    %241 = vmatpush1.msra.mxu0 %v35
    %242 = vmatprep.subr.mxu0 0.0
    %243 = vmatpush1.msra.mxu0 %v36
    %244 = vmatprep.subr.mxu0 0.0
    %245 = vmatpush1.msra.mxu0 0.0
    %246 = vmatprep.subr.mxu0 0.0
    %247 = vmatpush1.msra.mxu0 0.0
    %248 = vmatprep.subr.mxu0 0.0
    %249 = vmatpush1.msra.mxu0 0.0
    %250 = vmatprep.subr.mxu0 0.0
    %251 = vmatpush1.msra.mxu0 0.0
    %252 = vmatprep.subr.mxu0 0.0
    %253 = vmatpush1.msra.mxu0 0.0
    %254 = vmatprep.subr.mxu0 0.0
    %255 = vmatpush1.msra.mxu0 0.0
    %256 = vmatprep.subr.mxu0 0.0
    %257 = vmatpush1.msra.mxu0 0.0
    %258 = vmatprep.subr.mxu0 0.0
    %259 = vmatpush1.msra.mxu0 0.0
    %260 = vmatprep.subr.mxu0 0.0
    %261 = vmatpush1.msra.mxu0 0.0
    %262 = vmatprep.subr.mxu0 0.0
    %263 = vmatpush1.msra.mxu0 0.0
    %264 = vmatprep.subr.mxu0 0.0
    %265 = vmatpush1.msra.mxu0 0.0
    %266 = vmatprep.subr.mxu0 0.0
    %267 = vmatpush1.msra.mxu0 0.0
    %268 = vmatprep.subr.mxu0 0.0
    %269 = vmatpush1.msra.mxu0 0.0
    %270 = vmatprep.subr.mxu0 0.0
    %271 = vmatpush1.msra.mxu0 0.0
    %272 = vmatprep.subr.mxu0 0.0
    %273 = vmatpush1.msra.mxu0 0.0
    %274 = vmatprep.subr.mxu0 0.0
    %275 = vmatpush1.msra.mxu0 0.0
    %276 = vmatprep.subr.mxu0 0.0
    %277 = vmatpush1.msra.mxu0 0.0
    %278 = vmatprep.subr.mxu0 0.0
    %279 = vmatpush1.msra.mxu0 0.0
    %280 = vmatprep.subr.mxu0 0.0
    %281 = vmatpush1.msra.mxu0 0.0
    %282 = vmatprep.subr.mxu0 0.0
    %283 = vmatpush1.msra.mxu0 0.0
    %284 = vmatprep.subr.mxu0 0.0
    %285 = vmatpush1.msra.mxu0 0.0
    %286 = vmatprep.subr.mxu0 0.0
    %287 = vmatpush1.msra.mxu0 0.0
    %288 = vmatprep.subr.mxu0 0.0
    %289 = vmatpush1.msra.mxu0 0.0
    %290 = vmatprep.subr.mxu0 0.0
    %291 = vmatpush1.msra.mxu0 0.0
    %292 = vmatprep.subr.mxu0 0.0
    %293 = vmatpush1.msra.mxu0 0.0
    %294 = vmatprep.subr.mxu0 0.0
    %295 = vmatpush1.msra.mxu0 0.0
    %296 = vmatprep.subr.mxu0 0.0
    %297 = vmatpush1.msra.mxu0 0.0
    %298 = vmatprep.subr.mxu0 0.0
    %299 = vmatpush1.msra.mxu0 0.0
    %300 = vmatprep.mubr.f32.mxu0 0.0
    %301 = vmatmul.mubr.f32.gmra.mrb[0].mxu0 %v231
    %v302 = vpop.f32.mrb[0].mxu0
    %v303 = vadd.f32 0.0, %v302
    %v304 = vpop.f32.mrb[0].mxu0
    %305 = vmatprep.mubr.f32.mxu0 0.0
    %306 = vmatmul.mubr.f32.gmra.mrb[0].mxu0 %v234
    %v307 = vpop.f32.mrb[0].mxu0
    %v308 = vadd.f32 0.0, %v307
    %v309 = vpop.f32.mrb[0].mxu0
    %310 = vdwg.mxu0
    %vm311 = vcmask 130048
    %v313 = vsel %vm311, %v221, 0
    %v316 = vsel %vm311, %v228, 0
    %318 = vmatprep.subr.mxu0 0.0
    %319 = vmatpush1.msra.mxu0 %v31
    %320 = vmatprep.subr.mxu0 0.0
    %321 = vmatpush1.msra.mxu0 %v32
    %322 = vmatprep.subr.mxu0 0.0
    %323 = vmatpush1.msra.mxu0 0.0
    %324 = vmatprep.subr.mxu0 0.0
    %325 = vmatpush1.msra.mxu0 0.0
    %326 = vmatprep.subr.mxu0 0.0
    %327 = vmatpush1.msra.mxu0 0.0
    %328 = vmatprep.subr.mxu0 0.0
    %329 = vmatpush1.msra.mxu0 0.0
    %330 = vmatprep.subr.mxu0 0.0
    %331 = vmatpush1.msra.mxu0 0.0
    %332 = vmatprep.subr.mxu0 0.0
    %333 = vmatpush1.msra.mxu0 0.0
    %334 = vmatprep.subr.mxu0 0.0
    %335 = vmatpush1.msra.mxu0 0.0
    %336 = vmatprep.subr.mxu0 0.0
    %337 = vmatpush1.msra.mxu0 0.0
    %338 = vmatprep.subr.mxu0 0.0
    %339 = vmatpush1.msra.mxu0 0.0
    %340 = vmatprep.subr.mxu0 0.0
    %341 = vmatpush1.msra.mxu0 0.0
    %342 = vmatprep.subr.mxu0 0.0
    %343 = vmatpush1.msra.mxu0 0.0
    %344 = vmatprep.subr.mxu0 0.0
    %345 = vmatpush1.msra.mxu0 0.0
    %346 = vmatprep.subr.mxu0 0.0
    %347 = vmatpush1.msra.mxu0 0.0
    %348 = vmatprep.subr.mxu0 0.0
    %349 = vmatpush1.msra.mxu0 0.0
    %350 = vmatprep.subr.mxu0 0.0
    %351 = vmatpush1.msra.mxu0 0.0
    %352 = vmatprep.subr.mxu0 0.0
    %353 = vmatpush1.msra.mxu0 0.0
    %354 = vmatprep.subr.mxu0 0.0
    %355 = vmatpush1.msra.mxu0 0.0
    %356 = vmatprep.subr.mxu0 0.0
    %357 = vmatpush1.msra.mxu0 0.0
    %358 = vmatprep.subr.mxu0 0.0
    %359 = vmatpush1.msra.mxu0 0.0
    %360 = vmatprep.subr.mxu0 0.0
    %361 = vmatpush1.msra.mxu0 0.0
    %362 = vmatprep.subr.mxu0 0.0
    %363 = vmatpush1.msra.mxu0 0.0
    %364 = vmatprep.subr.mxu0 0.0
    %365 = vmatpush1.msra.mxu0 0.0
    %366 = vmatprep.subr.mxu0 0.0
    %367 = vmatpush1.msra.mxu0 0.0
    %368 = vmatprep.subr.mxu0 0.0
    %369 = vmatpush1.msra.mxu0 0.0
    %370 = vmatprep.subr.mxu0 0.0
    %371 = vmatpush1.msra.mxu0 0.0
    %372 = vmatprep.subr.mxu0 0.0
    %373 = vmatpush1.msra.mxu0 0.0
    %374 = vmatprep.subr.mxu0 0.0
    %375 = vmatpush1.msra.mxu0 0.0
    %376 = vmatprep.subr.mxu0 0.0
    %377 = vmatpush1.msra.mxu0 0.0
    %378 = vmatprep.subr.mxu0 0.0
    %379 = vmatpush1.msra.mxu0 0.0
    %380 = vmatprep.subr.mxu0 0.0
    %381 = vmatpush1.msra.mxu0 0.0
    %382 = vmatprep.mubr.f32.mxu0 0.0
    %383 = vmatmul.mubr.f32.gmra.mrb[0].mxu0 %v313
    %v384 = vpop.f32.mrb[0].mxu0
    %v385 = vadd.f32 %v303, %v384
    %v386 = vpop.f32.mrb[0].mxu0
    %387 = vmatprep.mubr.f32.mxu0 0.0
    %388 = vmatmul.mubr.f32.gmra.mrb[0].mxu0 %v316
    %v389 = vpop.f32.mrb[0].mxu0
    %v390 = vadd.f32 %v308, %v389
    %v391 = vpop.f32.mrb[0].mxu0
    %392 = vdwg.mxu0
    %v393 = vlaneseq
    %v394 = vshrl.u32 %v393, 7
    %v395 = vsub.s32 0, %v394
    %v396 = vrot.slane %v41, %v395
    %v398 = vsel %vm229, %v385, 0
    %v401 = vsel %vm229, %v390, 0
    %403 = vmatprep.subr.mxu0 0.0
    %404 = vmatpush1.msra.mxu0 %v37
    %405 = vmatprep.subr.mxu0 0.0
    %406 = vmatpush1.msra.mxu0 %v38
    %407 = vmatprep.subr.mxu0 0.0
    %408 = vmatpush1.msra.mxu0 %v39
    %409 = vmatprep.subr.mxu0 0.0
    %410 = vmatpush1.msra.mxu0 %v40
    %411 = vmatprep.subr.mxu0 0.0
    %412 = vmatpush1.msra.mxu0 0.0
    %413 = vmatprep.subr.mxu0 0.0
    %414 = vmatpush1.msra.mxu0 0.0
    %415 = vmatprep.subr.mxu0 0.0
    %416 = vmatpush1.msra.mxu0 0.0
    %417 = vmatprep.subr.mxu0 0.0
    %418 = vmatpush1.msra.mxu0 0.0
    %419 = vmatprep.subr.mxu0 0.0
    %420 = vmatpush1.msra.mxu0 0.0
    %421 = vmatprep.subr.mxu0 0.0
    %422 = vmatpush1.msra.mxu0 0.0
    %423 = vmatprep.subr.mxu0 0.0
    %424 = vmatpush1.msra.mxu0 0.0
    %425 = vmatprep.subr.mxu0 0.0
    %426 = vmatpush1.msra.mxu0 0.0
    %427 = vmatprep.subr.mxu0 0.0
    %428 = vmatpush1.msra.mxu0 0.0
    %429 = vmatprep.subr.mxu0 0.0
    %430 = vmatpush1.msra.mxu0 0.0
    %431 = vmatprep.subr.mxu0 0.0
    %432 = vmatpush1.msra.mxu0 0.0
    %433 = vmatprep.subr.mxu0 0.0
    %434 = vmatpush1.msra.mxu0 0.0
    %435 = vmatprep.subr.mxu0 0.0
    %436 = vmatpush1.msra.mxu0 0.0
    %437 = vmatprep.subr.mxu0 0.0
    %438 = vmatpush1.msra.mxu0 0.0
    %439 = vmatprep.subr.mxu0 0.0
    %440 = vmatpush1.msra.mxu0 0.0
    %441 = vmatprep.subr.mxu0 0.0
    %442 = vmatpush1.msra.mxu0 0.0
    %443 = vmatprep.subr.mxu0 0.0
    %444 = vmatpush1.msra.mxu0 0.0
    %445 = vmatprep.subr.mxu0 0.0
    %446 = vmatpush1.msra.mxu0 0.0
    %447 = vmatprep.subr.mxu0 0.0
    %448 = vmatpush1.msra.mxu0 0.0
    %449 = vmatprep.subr.mxu0 0.0
    %450 = vmatpush1.msra.mxu0 0.0
    %451 = vmatprep.subr.mxu0 0.0
    %452 = vmatpush1.msra.mxu0 0.0
    %453 = vmatprep.subr.mxu0 0.0
    %454 = vmatpush1.msra.mxu0 0.0
    %455 = vmatprep.subr.mxu0 0.0
    %456 = vmatpush1.msra.mxu0 0.0
    %457 = vmatprep.subr.mxu0 0.0
    %458 = vmatpush1.msra.mxu0 0.0
    %459 = vmatprep.subr.mxu0 0.0
    %460 = vmatpush1.msra.mxu0 0.0
    %461 = vmatprep.subr.mxu0 0.0
    %462 = vmatpush1.msra.mxu0 0.0
    %463 = vmatprep.subr.mxu0 0.0
    %464 = vmatpush1.msra.mxu0 0.0
    %465 = vmatprep.subr.mxu0 0.0
    %466 = vmatpush1.msra.mxu0 0.0
    %467 = vmatprep.mubr.f32.mxu0 0.0
    %468 = vmatmul.mubr.f32.gmra.mrb[0].mxu0 %v398
    %v469 = vpop.f32.mrb[0].mxu0
    %v470 = vadd.f32 %v396, %v469
    %v471 = vpop.f32.mrb[0].mxu0
    %472 = vmatprep.mubr.f32.mxu0 0.0
    %473 = vmatmul.mubr.f32.gmra.mrb[0].mxu0 %v401
    %v474 = vpop.f32.mrb[0].mxu0
    %v475 = vadd.f32 %v396, %v474
    %v476 = vpop.f32.mrb[0].mxu0
    %477 = vdwg.mxu0
    %v478 = vxor.u32 %v470, 2147483648
    %v479 = vxor.u32 %v475, 2147483648
    %v480 = vmul.f32 %v478, 1.442695
    %v481 = vpow.pop %v480
    %v482 = vmul.f32 %v479, 1.442695
    %v483 = vpow.pop %v482
    %v484 = vadd.f32 %v481, 1.0
    %v485 = vadd.f32 %v483, 1.0
    %v486 = vrcp.pop %v484
    %v487 = vmul.f32 1.0, %v486
    %v488 = vrcp.pop %v485
    %v489 = vmul.f32 1.0, %v488
    %v491 = vsel %vm311, %v487, 0
    %v494 = vsel %vm311, %v489, 0
    %496 = vmatprep.subr.mxu0 0.0
    %497 = vmatpush1.msra.mxu0 %v48
    %498 = vmatprep.subr.mxu0 0.0
    %499 = vmatpush1.msra.mxu0 %v49
    %500 = vmatprep.subr.mxu0 0.0
    %501 = vmatpush1.msra.mxu0 0.0
    %502 = vmatprep.subr.mxu0 0.0
    %503 = vmatpush1.msra.mxu0 0.0
    %504 = vmatprep.subr.mxu0 0.0
    %505 = vmatpush1.msra.mxu0 0.0
    %506 = vmatprep.subr.mxu0 0.0
    %507 = vmatpush1.msra.mxu0 0.0
    %508 = vmatprep.subr.mxu0 0.0
    %509 = vmatpush1.msra.mxu0 0.0
    %510 = vmatprep.subr.mxu0 0.0
    %511 = vmatpush1.msra.mxu0 0.0
    %512 = vmatprep.subr.mxu0 0.0
    %513 = vmatpush1.msra.mxu0 0.0
    %514 = vmatprep.subr.mxu0 0.0
    %515 = vmatpush1.msra.mxu0 0.0
    %516 = vmatprep.subr.mxu0 0.0
    %517 = vmatpush1.msra.mxu0 0.0
    %518 = vmatprep.subr.mxu0 0.0
    %519 = vmatpush1.msra.mxu0 0.0
    %520 = vmatprep.subr.mxu0 0.0
    %521 = vmatpush1.msra.mxu0 0.0
    %522 = vmatprep.subr.mxu0 0.0
    %523 = vmatpush1.msra.mxu0 0.0
    %524 = vmatprep.subr.mxu0 0.0
    %525 = vmatpush1.msra.mxu0 0.0
    %526 = vmatprep.subr.mxu0 0.0
    %527 = vmatpush1.msra.mxu0 0.0
    %528 = vmatprep.subr.mxu0 0.0
    %529 = vmatpush1.msra.mxu0 0.0
    %530 = vmatprep.subr.mxu0 0.0
    %531 = vmatpush1.msra.mxu0 0.0
    %532 = vmatprep.subr.mxu0 0.0
    %533 = vmatpush1.msra.mxu0 0.0
    %534 = vmatprep.subr.mxu0 0.0
    %535 = vmatpush1.msra.mxu0 0.0
    %536 = vmatprep.subr.mxu0 0.0
    %537 = vmatpush1.msra.mxu0 0.0
    %538 = vmatprep.subr.mxu0 0.0
    %539 = vmatpush1.msra.mxu0 0.0
    %540 = vmatprep.subr.mxu0 0.0
    %541 = vmatpush1.msra.mxu0 0.0
    %542 = vmatprep.subr.mxu0 0.0
    %543 = vmatpush1.msra.mxu0 0.0
    %544 = vmatprep.subr.mxu0 0.0
    %545 = vmatpush1.msra.mxu0 0.0
    %546 = vmatprep.subr.mxu0 0.0
    %547 = vmatpush1.msra.mxu0 0.0
    %548 = vmatprep.subr.mxu0 0.0
    %549 = vmatpush1.msra.mxu0 0.0
    %550 = vmatprep.subr.mxu0 0.0
    %551 = vmatpush1.msra.mxu0 0.0
    %552 = vmatprep.subr.mxu0 0.0
    %553 = vmatpush1.msra.mxu0 0.0
    %554 = vmatprep.subr.mxu0 0.0
    %555 = vmatpush1.msra.mxu0 0.0
    %556 = vmatprep.subr.mxu0 0.0
    %557 = vmatpush1.msra.mxu0 0.0
    %558 = vmatprep.subr.mxu0 0.0
    %559 = vmatpush1.msra.mxu0 0.0
    %560 = vmatprep.mubr.f32.mxu0 0.0
    %561 = vmatmul.mubr.f32.gmra.mrb[0].mxu0 %v491
    %v562 = vpop.f32.mrb[0].mxu0
    %v563 = vadd.f32 0.0, %v562
    %v564 = vpop.f32.mrb[0].mxu0
    %565 = vmatprep.mubr.f32.mxu0 0.0
    %566 = vmatmul.mubr.f32.gmra.mrb[0].mxu0 %v494
    %v567 = vpop.f32.mrb[0].mxu0
    %v568 = vadd.f32 0.0, %v567
    %v569 = vpop.f32.mrb[0].mxu0
    %570 = vdwg.mxu0
    %v572 = vsel %vm50, %v124, 0
    %v575 = vsel %vm50, %v129, 0
    %577 = vmatprep.subr.mxu0 0.0
    %578 = vmatpush1.msra.mxu0 %v25
    %579 = vmatprep.subr.mxu0 0.0
    %580 = vmatpush1.msra.mxu0 %v26
    %581 = vmatprep.subr.mxu0 0.0
    %582 = vmatpush1.msra.mxu0 %v27
    %583 = vmatprep.subr.mxu0 0.0
    %584 = vmatpush1.msra.mxu0 %v28
    %585 = vmatprep.subr.mxu0 0.0
    %586 = vmatpush1.msra.mxu0 %v29
    %587 = vmatprep.subr.mxu0 0.0
    %588 = vmatpush1.msra.mxu0 %v30
    %589 = vmatprep.subr.mxu0 0.0
    %590 = vmatpush1.msra.mxu0 0.0
    %591 = vmatprep.subr.mxu0 0.0
    %592 = vmatpush1.msra.mxu0 0.0
    %593 = vmatprep.subr.mxu0 0.0
    %594 = vmatpush1.msra.mxu0 0.0
    %595 = vmatprep.subr.mxu0 0.0
    %596 = vmatpush1.msra.mxu0 0.0
    %597 = vmatprep.subr.mxu0 0.0
    %598 = vmatpush1.msra.mxu0 0.0
    %599 = vmatprep.subr.mxu0 0.0
    %600 = vmatpush1.msra.mxu0 0.0
    %601 = vmatprep.subr.mxu0 0.0
    %602 = vmatpush1.msra.mxu0 0.0
    %603 = vmatprep.subr.mxu0 0.0
    %604 = vmatpush1.msra.mxu0 0.0
    %605 = vmatprep.subr.mxu0 0.0
    %606 = vmatpush1.msra.mxu0 0.0
    %607 = vmatprep.subr.mxu0 0.0
    %608 = vmatpush1.msra.mxu0 0.0
    %609 = vmatprep.subr.mxu0 0.0
    %610 = vmatpush1.msra.mxu0 0.0
    %611 = vmatprep.subr.mxu0 0.0
    %612 = vmatpush1.msra.mxu0 0.0
    %613 = vmatprep.subr.mxu0 0.0
    %614 = vmatpush1.msra.mxu0 0.0
    %615 = vmatprep.subr.mxu0 0.0
    %616 = vmatpush1.msra.mxu0 0.0
    %617 = vmatprep.subr.mxu0 0.0
    %618 = vmatpush1.msra.mxu0 0.0
    %619 = vmatprep.subr.mxu0 0.0
    %620 = vmatpush1.msra.mxu0 0.0
    %621 = vmatprep.subr.mxu0 0.0
    %622 = vmatpush1.msra.mxu0 0.0
    %623 = vmatprep.subr.mxu0 0.0
    %624 = vmatpush1.msra.mxu0 0.0
    %625 = vmatprep.subr.mxu0 0.0
    %626 = vmatpush1.msra.mxu0 0.0
    %627 = vmatprep.subr.mxu0 0.0
    %628 = vmatpush1.msra.mxu0 0.0
    %629 = vmatprep.subr.mxu0 0.0
    %630 = vmatpush1.msra.mxu0 0.0
    %631 = vmatprep.subr.mxu0 0.0
    %632 = vmatpush1.msra.mxu0 0.0
    %633 = vmatprep.subr.mxu0 0.0
    %634 = vmatpush1.msra.mxu0 0.0
    %635 = vmatprep.subr.mxu0 0.0
    %636 = vmatpush1.msra.mxu0 0.0
    %637 = vmatprep.subr.mxu0 0.0
    %638 = vmatpush1.msra.mxu0 0.0
    %639 = vmatprep.subr.mxu0 0.0
    %640 = vmatpush1.msra.mxu0 0.0
    %641 = vmatprep.mubr.f32.mxu0 0.0
    %642 = vmatmul.mubr.f32.gmra.mrb[0].mxu0 %v572
    %v643 = vpop.f32.mrb[0].mxu0
    %v644 = vadd.f32 0.0, %v643
    %v645 = vpop.f32.mrb[0].mxu0
    %646 = vmatprep.mubr.f32.mxu0 0.0
    %647 = vmatmul.mubr.f32.gmra.mrb[0].mxu0 %v575
    %v648 = vpop.f32.mrb[0].mxu0
    %v649 = vadd.f32 0.0, %v648
    %v650 = vpop.f32.mrb[0].mxu0
    %651 = vdwg.mxu0
    %v652 = vmul.f32 %v563, %v644
    %v653 = vmul.f32 %v568, %v649
    %654 = vst.msk [vmem:[#allocation2] sm:$0xff] %vm229, %v385
    %655 = vst.msk [vmem:[#allocation2 + $0x8] sm:$0xff] %vm229, %v390
    %658 = vrot.lane.b32.xlu0 %v652, 32
    %v659 = vpop.permute.xlu0 %658
    %660 = vrot.lane.b32.xlu0 %v653, 32
    %v661 = vpop.permute.xlu0 %660
    %vm664 = vcmask 654592
    %665 = vst.msk [vmem:[#allocation2] sm:$0xff] %vm664, %v659
    %666 = vst.msk [vmem:[#allocation2 + $0x8] sm:$0xff] %vm664, %v661
    // Predicated region
    $region14: #{tpu_custom_call.1} parent=1 // pred_check
      _
    $region15: #{tpu_custom_call.1} parent=1 // pred_check_branch
      %668 = sbr.rel (0) target = $region17
    $region16: #{tpu_custom_call.1} parent=1 // pred_region
      %s670 = ssub.s32 256, 256
      %671 = vsyncadd [#allocation3], %s670
      %s672 = sshll.u32 [#allocation2], 4
      %s673 = int_to_ptr.vmem [resolvable:$true] %s672
      %678 = dma.vmem_to_hbm [thread:$0]  %s673, 256, %s3, [#allocation3], 128, 128, 8
    $region17: #{tpu_custom_call.1} parent=1 // pred_fallthru
      _
    // Predicated region
    $region18: #{tpu_custom_call.1} parent=1 // pred_check
      _
    $region19: #{tpu_custom_call.1} parent=1 // pred_check_branch
      %680 = sbr.rel (0) target = $region21
    $region20: #{tpu_custom_call.1} parent=1 // pred_region
      %681 = dma.done [#allocation3], 256
    $region21: #{tpu_custom_call.1} parent=1 // pred_fallthru
      _
    %682 = vsyncpa [#allocation3], 1

</llo_original>
